<compile_context>
chip_gen: v6e
topology: v6e:2x2x1
jax: 0.10.0
libtpu: 0.0.40
codegen_flags: <defaults>
</compile_context>

<pallas_src>
import jax
import jax.numpy as jnp
from jax.experimental import pallas as pl
from jax.experimental.pallas import tpu as pltpu


LAM = 0.003
LEAKY_SLOPE = 0.2


def prior_loss_kernel(x_ref, w1_ref, b1_ref, w2r_ref, b2_ref, scale_ref,
                      nrows_ref, out_ref, acc_ref):
    # x_ref:   (TB, F)  bf16  flattened generated-image tile
    # w1_ref:  (F, HP)  bf16  (hidden dim zero-padded to HP=128k lanes)
    # b1_ref:  (1, HP)  f32
    # w2r_ref: (1, HP)  f32   second-layer weights as a row
    # b2_ref / scale_ref / nrows_ref: (1, 1) SMEM scalars
    # out_ref: (1, 1)   f32 loss
    # acc_ref: (1, 1)   f32 VMEM running sum (persists across grid steps)
    i = pl.program_id(0)

    @pl.when(i == 0)
    def _():
        acc_ref[...] = jnp.zeros_like(acc_ref)

    # ---- Linear(F, H) on the MXU: bf16 operands, f32 accumulation ----
    h = jnp.dot(x_ref[...], w1_ref[...], preferred_element_type=jnp.float32)
    h = h + b1_ref[...]
    h = jnp.where(h > 0, h, LEAKY_SLOPE * h)              # LeakyReLU(0.2)

    # ---- Linear(H, 1): VPU multiply + lane reduction (no 1-column matmul) ----
    logits = jnp.sum(h * w2r_ref[...], axis=-1, keepdims=True) + b2_ref[0, 0]

    # ---- log(1 - sigmoid(z)) == -softplus(z), numerically stable ----
    l_p = -(jnp.maximum(logits, 0.0)
            + jnp.log(1.0 + jnp.exp(-jnp.abs(logits))))   # (TB, 1)

    # ---- mask batch-padding rows so they contribute nothing to the mean ----
    tb = x_ref.shape[0]
    row = i * tb + jax.lax.broadcasted_iota(jnp.int32, (tb, 1), 0)
    l_p = jnp.where(row < nrows_ref[0, 0], l_p, 0.0)

    acc_ref[...] += jnp.sum(l_p, keepdims=True)

    @pl.when(i == pl.num_programs(0) - 1)
    def _():
        # scale = lam / B
        out_ref[...] = acc_ref[...] * scale_ref[0, 0]


def prior_loss(generated, w1, b1, w2, b2, lam=LAM):
    """generated: (B, C, H, W) float32 (NCHW, matching the PyTorch convention)."""
    B = generated.shape[0]
    F = 1
    for d in generated.shape[1:]:
        F *= d
    x = generated.reshape(B, F)

    Hdim = w1.shape[1]
    HP = max(128, ((Hdim + 127) // 128) * 128)     # pad hidden dim to full lanes

    # ---- pad / cast parameters (zero columns are a numerical no-op) ----
    w1p = jnp.zeros((F, HP), jnp.bfloat16).at[:, :Hdim].set(w1.astype(jnp.bfloat16))
    b1p = jnp.zeros((1, HP), jnp.float32).at[:, :Hdim].set(
        b1.reshape(1, Hdim).astype(jnp.float32))
    w2r = jnp.zeros((1, HP), jnp.float32).at[:, :Hdim].set(
        w2.reshape(1, Hdim).astype(jnp.float32))
    b2s = jnp.asarray(b2, jnp.float32).reshape(1, 1)

    # ---- pick a batch tile: big enough to pipeline, small enough for VMEM ----
    TB = 128
    # keep a double-buffered bf16 x tile under ~8 MiB (safe on v5e/v6e/v7x)
    while TB > 8 and TB * F * 2 * 2 > (8 << 20):
        TB //= 2
    if B <= TB:
        TB = max(8, ((B + 7) // 8) * 8)            # single padded tile
    B_pad = ((B + TB - 1) // TB) * TB
    grid = B_pad // TB

    x_pad = jnp.zeros((B_pad, F), jnp.bfloat16).at[:B, :].set(x.astype(jnp.bfloat16))

    scale = jnp.full((1, 1), lam / B, dtype=jnp.float32)
    nrows = jnp.full((1, 1), B, dtype=jnp.int32)

    # TODO(synk): for very large F (high-res images) stream w1 / x in F-slabs
    # with a second 'arbitrary' grid axis and an h accumulator; and on v7x,
    # shard the batch grid axis across the two TensorCores with per-core
    # partial sums combined in the wrapper.
    out = pl.pallas_call(
        prior_loss_kernel,
        out_shape=jax.ShapeDtypeStruct((1, 1), jnp.float32),
        grid_spec=pltpu.PrefetchScalarGridSpec(
            num_scalar_prefetch=0,
            grid=(grid,),
            in_specs=[
                pl.BlockSpec((TB, F), lambda i: (i, 0)),          # x tile (streamed)
                pl.BlockSpec((F, HP), lambda i: (0, 0)),          # w1 (VMEM-resident)
                pl.BlockSpec((1, HP), lambda i: (0, 0)),          # b1
                pl.BlockSpec((1, HP), lambda i: (0, 0)),          # w2 row
                pl.BlockSpec((1, 1), lambda i: (0, 0),
                             memory_space=pltpu.SMEM),            # b2
                pl.BlockSpec((1, 1), lambda i: (0, 0),
                             memory_space=pltpu.SMEM),            # lam / B
                pl.BlockSpec((1, 1), lambda i: (0, 0),
                             memory_space=pltpu.SMEM),            # true B
            ],
            out_specs=pl.BlockSpec((1, 1), lambda i: (0, 0)),
            scratch_shapes=[pltpu.VMEM((1, 1), jnp.float32)],     # running sum
        ),
        compiler_params=pltpu.CompilerParams(
            dimension_semantics=("arbitrary",)),                  # carried accumulator
        cost_estimate=pl.CostEstimate(
            flops=2 * B_pad * F * HP + 4 * B_pad * HP,
            transcendentals=2 * B_pad,
            bytes_accessed=x_pad.size * 2 + w1p.size * 2 + (2 * HP + 3) * 4),
    )(x_pad, w1p, b1p, w2r, b2s, scale, nrows)
    return out[0, 0]


if __name__ == "__main__":
    # Small shapes consistent with the forward pass: generated images NCHW.
    B, C, H, W = 2, 4, 16, 16
    F = C * H * W
    HID = 32

    key = jax.random.PRNGKey(0)
    k_x, k_w1, k_b1, k_w2, k_b2 = jax.random.split(key, 5)

    generated = jax.random.normal(k_x, (B, C, H, W), dtype=jnp.float32)

    # Deterministic synthetic discriminator parameters (small scale keeps the
    # sigmoid away from saturation; the kernel itself is saturation-safe).
    w1 = 0.02 * jax.random.normal(k_w1, (F, HID), dtype=jnp.float32)
    b1 = 0.01 * jax.random.normal(k_b1, (1, HID), dtype=jnp.float32)
    w2 = 0.02 * jax.random.normal(k_w2, (HID, 1), dtype=jnp.float32)
    b2 = 0.01 * jax.random.normal(k_b2, (1, 1), dtype=jnp.float32)

    loss = prior_loss(generated, w1, b1, w2, b2, lam=LAM)
    loss = jax.block_until_ready(loss)

    # Pure-JAX reference (same bf16 first-layer precision as the kernel).
    x = generated.reshape(B, F)
    h = jnp.dot(x.astype(jnp.bfloat16), w1.astype(jnp.bfloat16),
                preferred_element_type=jnp.float32) + b1
    h = jnp.where(h > 0, h, LEAKY_SLOPE * h)
    v = jax.nn.sigmoid(h @ w2 + b2)
    ref = LAM * jnp.mean(jnp.log(jnp.ones_like(v) - v))
    assert jnp.allclose(loss, ref, rtol=1e-4, atol=1e-5), (loss, ref)

    print("KERNEL_OK")
</pallas_src>

<mosaic_0001>
module attributes {stable_mosaic.version = 11 : i64} {
  func.func @prior_loss_kernel(%arg0: i32, %arg1: memref<8x1024xbf16, #tpu.memory_space<vmem>>, %arg2: memref<1024x128xbf16, #tpu.memory_space<vmem>>, %arg3: memref<1x128xf32, #tpu.memory_space<vmem>>, %arg4: memref<1x128xf32, #tpu.memory_space<vmem>>, %arg5: memref<1x1xf32, #tpu.memory_space<smem>>, %arg6: memref<1x1xf32, #tpu.memory_space<smem>>, %arg7: memref<1x1xi32, #tpu.memory_space<smem>>, %arg8: memref<1x1xf32, #tpu.memory_space<vmem>>, %arg9: memref<1x1xf32, #tpu.memory_space<vmem>>) attributes {dimension_semantics = [#tpu.dimension_semantics<arbitrary>], iteration_bounds = array<i64: 1>, scalar_prefetch = 0 : i64, scratch_operands = 1 : i64, tpu.core_type = #tpu.core_type<tc>, window_params = [{transform_indices = @transform_0, window_bounds = array<i64: 8, 1024>}, {pipeline_mode = #tpu.pipeline_mode<synchronous>, transform_indices = @transform_1, window_bounds = array<i64: 1024, 128>}, {pipeline_mode = #tpu.pipeline_mode<synchronous>, transform_indices = @transform_2, window_bounds = array<i64: 1, 128>}, {pipeline_mode = #tpu.pipeline_mode<synchronous>, transform_indices = @transform_3, window_bounds = array<i64: 1, 128>}, {transform_indices = @transform_4, window_bounds = array<i64: 1, 1>}, {transform_indices = @transform_5, window_bounds = array<i64: 1, 1>}, {transform_indices = @transform_6, window_bounds = array<i64: 1, 1>}, {pipeline_mode = #tpu.pipeline_mode<synchronous>, transform_indices = @transform_7, window_bounds = array<i64: 1, 1>}]} {
    %c0_i32 = arith.constant 0 : i32
    %0 = arith.cmpi eq, %arg0, %c0_i32 : i32
    %1 = arith.extui %0 : i1 to i32
    %c0_i32_0 = arith.constant 0 : i32
    %2 = arith.cmpi ne, %1, %c0_i32_0 : i32
    scf.if %2 {
      %cst_27 = arith.constant 0.000000e+00 : f32
      %54 = vector.broadcast %cst_27 : f32 to vector<1x1xf32>
      %c0_28 = arith.constant 0 : index
      %c0_29 = arith.constant 0 : index
      %55 = vector.load %arg9[%c0_28, %c0_29] : memref<1x1xf32, #tpu.memory_space<vmem>>, vector<1x1xf32>
      tpu.vector_store %arg9[%c0_28, %c0_29], %54 {strides = array<i32>} : memref<1x1xf32, #tpu.memory_space<vmem>>, vector<1x1xf32>,
    } else {
    }
    %c0 = arith.constant 0 : index
    %c0_1 = arith.constant 0 : index
    %3 = vector.load %arg1[%c0, %c0_1] : memref<8x1024xbf16, #tpu.memory_space<vmem>>, vector<8x1024xbf16>
    %c0_2 = arith.constant 0 : index
    %c0_3 = arith.constant 0 : index
    %4 = vector.load %arg2[%c0_2, %c0_3] : memref<1024x128xbf16, #tpu.memory_space<vmem>>, vector<1024x128xbf16>
    %cst = arith.constant dense<0.000000e+00> : vector<8x128xf32>
    %5 = tpu.matmul %3, %4, %cst {dimension_numbers = #tpu.dot_dimension_numbers<[1], [0], [0], [1], [0, 0, 1, 1], [], []>} : vector<8x1024xbf16>, vector<1024x128xbf16>, vector<8x128xf32> -> vector<8x128xf32>
    %c0_4 = arith.constant 0 : index
    %c0_5 = arith.constant 0 : index
    %6 = vector.load %arg3[%c0_4, %c0_5] : memref<1x128xf32, #tpu.memory_space<vmem>>, vector<1x128xf32>
    %7 = vector.broadcast %6 : vector<1x128xf32> to vector<8x128xf32>
    %8 = arith.addf %5, %7 : vector<8x128xf32>
    %cst_6 = arith.constant 0.000000e+00 : f32
    %9 = vector.broadcast %cst_6 : f32 to vector<8x128xf32>
    %10 = arith.cmpf ogt, %8, %9 : vector<8x128xf32>
    %cst_7 = arith.constant 2.000000e-01 : f32
    %11 = vector.broadcast %cst_7 : f32 to vector<8x128xf32>
    %12 = arith.mulf %11, %8 : vector<8x128xf32>
    %13 = arith.select %10, %8, %12 : vector<8x128xi1>, vector<8x128xf32>
    %c0_8 = arith.constant 0 : index
    %c0_9 = arith.constant 0 : index
    %14 = vector.load %arg4[%c0_8, %c0_9] : memref<1x128xf32, #tpu.memory_space<vmem>>, vector<1x128xf32>
    %15 = vector.broadcast %14 : vector<1x128xf32> to vector<8x128xf32>
    %16 = arith.mulf %13, %15 : vector<8x128xf32>
    %cst_10 = arith.constant dense<0.000000e+00> : vector<8xf32>
    %17 = vector.multi_reduction <add>, %16, %cst_10 [1] : vector<8x128xf32> to vector<8xf32>
    %18 = vector.shape_cast %17 : vector<8xf32> to vector<8x1xf32>
    %c0_11 = arith.constant 0 : index
    %c0_12 = arith.constant 0 : index
    %19 = memref.load %arg5[%c0_11, %c0_12] : memref<1x1xf32, #tpu.memory_space<smem>>
    %20 = vector.broadcast %19 : f32 to vector<8x1xf32>
    %21 = arith.addf %18, %20 : vector<8x1xf32>
    %cst_13 = arith.constant 0.000000e+00 : f32
    %22 = vector.broadcast %cst_13 : f32 to vector<8x1xf32>
    %23 = arith.maximumf %21, %22 : vector<8x1xf32>
    %24 = math.absf %21 : vector<8x1xf32>
    %cst_14 = arith.constant 0.000000e+00 : f32
    %25 = vector.broadcast %cst_14 : f32 to vector<8x1xf32>
    %26 = arith.subf %25, %24 : vector<8x1xf32>
    %27 = math.exp %26 : vector<8x1xf32>
    %cst_15 = arith.constant 1.000000e+00 : f32
    %28 = vector.broadcast %cst_15 : f32 to vector<8x1xf32>
    %29 = arith.addf %28, %27 : vector<8x1xf32>
    %30 = math.log %29 : vector<8x1xf32>
    %31 = arith.addf %23, %30 : vector<8x1xf32>
    %cst_16 = arith.constant 0.000000e+00 : f32
    %32 = vector.broadcast %cst_16 : f32 to vector<8x1xf32>
    %33 = arith.subf %32, %31 : vector<8x1xf32>
    %c8_i32 = arith.constant 8 : i32
    %34 = arith.muli %arg0, %c8_i32 : i32
    %35 = tpu.iota {dimensions = array<i32: 0>} : vector<8x1xi32>
    %36 = vector.broadcast %34 : i32 to vector<8x1xi32>
    %37 = arith.addi %36, %35 : vector<8x1xi32>
    %c0_17 = arith.constant 0 : index
    %c0_18 = arith.constant 0 : index
    %38 = memref.load %arg7[%c0_17, %c0_18] : memref<1x1xi32, #tpu.memory_space<smem>>
    %39 = vector.broadcast %38 : i32 to vector<8x1xi32>
    %40 = arith.cmpi slt, %37, %39 : vector<8x1xi32>
    %cst_19 = arith.constant 0.000000e+00 : f32
    %41 = vector.broadcast %cst_19 : f32 to vector<8x1xf32>
    %42 = arith.select %40, %33, %41 : vector<8x1xi1>, vector<8x1xf32>
    %c0_20 = arith.constant 0 : index
    %c0_21 = arith.constant 0 : index
    %43 = vector.load %arg9[%c0_20, %c0_21] : memref<1x1xf32, #tpu.memory_space<vmem>>, vector<1x1xf32>
    %44 = vector.shape_cast %42 : vector<8x1xf32> to vector<1x8x1xf32>
    %cst_22 = arith.constant dense<0.000000e+00> : vector<1xf32>
    %45 = vector.multi_reduction <add>, %44, %cst_22 [1, 2] : vector<1x8x1xf32> to vector<1xf32>
    %46 = vector.shape_cast %45 : vector<1xf32> to vector<1x1x1xf32>
    %47 = vector.extract %46[0, 0, 0] : f32 from vector<1x1x1xf32>
    %48 = vector.broadcast %47 : f32 to vector<1x1xf32>
    %49 = arith.addf %43, %48 : vector<1x1xf32>
    %c0_23 = arith.constant 0 : index
    %c0_24 = arith.constant 0 : index
    %50 = vector.load %arg9[%c0_23, %c0_24] : memref<1x1xf32, #tpu.memory_space<vmem>>, vector<1x1xf32>
    tpu.vector_store %arg9[%c0_23, %c0_24], %49 {strides = array<i32>} : memref<1x1xf32, #tpu.memory_space<vmem>>, vector<1x1xf32>,
    %c0_i32_25 = arith.constant 0 : i32
    %51 = arith.cmpi eq, %arg0, %c0_i32_25 : i32
    %52 = arith.extui %51 : i1 to i32
    %c0_i32_26 = arith.constant 0 : i32
    %53 = arith.cmpi ne, %52, %c0_i32_26 : i32
    scf.if %53 {
      %c0_27 = arith.constant 0 : index
      %c0_28 = arith.constant 0 : index
      %54 = vector.load %arg9[%c0_27, %c0_28] : memref<1x1xf32, #tpu.memory_space<vmem>>, vector<1x1xf32>
      %c0_29 = arith.constant 0 : index
      %c0_30 = arith.constant 0 : index
      %55 = memref.load %arg6[%c0_29, %c0_30] : memref<1x1xf32, #tpu.memory_space<smem>>
      %56 = vector.broadcast %55 : f32 to vector<1x1xf32>
      %57 = arith.mulf %54, %56 : vector<1x1xf32>
      %c0_31 = arith.constant 0 : index
      %c0_32 = arith.constant 0 : index
      %58 = vector.load %arg8[%c0_31, %c0_32] : memref<1x1xf32, #tpu.memory_space<vmem>>, vector<1x1xf32>
      tpu.vector_store %arg8[%c0_31, %c0_32], %57 {strides = array<i32>} : memref<1x1xf32, #tpu.memory_space<vmem>>, vector<1x1xf32>,
    } else {
    }
    return
  }
  func.func @transform_0(%arg0: i32) -> (i32, i32) {
    %c0_i32 = arith.constant 0 : i32
    %c0_i32_0 = arith.constant 0 : i32
    return %arg0, %c0_i32 : i32, i32
  }
  func.func @transform_1(%arg0: i32) -> (i32, i32) {
    %c0_i32 = arith.constant 0 : i32
    %c0_i32_0 = arith.constant 0 : i32
    %c0_i32_1 = arith.constant 0 : i32
    return %c0_i32, %c0_i32_0 : i32, i32
  }
  func.func @transform_2(%arg0: i32) -> (i32, i32) {
    %c0_i32 = arith.constant 0 : i32
    %c0_i32_0 = arith.constant 0 : i32
    %c0_i32_1 = arith.constant 0 : i32
    return %c0_i32, %c0_i32_0 : i32, i32
  }
  func.func @transform_3(%arg0: i32) -> (i32, i32) {
    %c0_i32 = arith.constant 0 : i32
    %c0_i32_0 = arith.constant 0 : i32
    %c0_i32_1 = arith.constant 0 : i32
    return %c0_i32, %c0_i32_0 : i32, i32
  }
  func.func @transform_4(%arg0: i32) -> (i32, i32) {
    %c0_i32 = arith.constant 0 : i32
    %c0_i32_0 = arith.constant 0 : i32
    %c0_i32_1 = arith.constant 0 : i32
    return %c0_i32, %c0_i32_0 : i32, i32
  }
  func.func @transform_5(%arg0: i32) -> (i32, i32) {
    %c0_i32 = arith.constant 0 : i32
    %c0_i32_0 = arith.constant 0 : i32
    %c0_i32_1 = arith.constant 0 : i32
    return %c0_i32, %c0_i32_0 : i32, i32
  }
  func.func @transform_6(%arg0: i32) -> (i32, i32) {
    %c0_i32 = arith.constant 0 : i32
    %c0_i32_0 = arith.constant 0 : i32
    %c0_i32_1 = arith.constant 0 : i32
    return %c0_i32, %c0_i32_0 : i32, i32
  }
  func.func @transform_7(%arg0: i32) -> (i32, i32) {
    %c0_i32 = arith.constant 0 : i32
    %c0_i32_0 = arith.constant 0 : i32
    %c0_i32_1 = arith.constant 0 : i32
    return %c0_i32, %c0_i32_0 : i32, i32
  }
}

</mosaic_0001>

<llo_original>
// kernel: tpu_custom_call.1
$region0: #{tpu_custom_call.1}
  #allocation0 [shape = 'u32[]', space=smem, size = 0x4, offset = 0x4, fixed_abs, tag = 'smem constant byte address 0x4 - core index']
  #allocation1 [shape = 'u32[144,128]{1,0:T(1,128)}', space=vmem, size = 0x12000, scoped, tag = 'internal scratch']
  #allocation2 [shape = 'f32[1,1]{1,0:T(1,128)}', space=vmem, size = 0x200, scoped, tag = 'scratch operand']
  #allocation3 [shape = 'f32[1,1]{1,0:T(1,128)S(6)}', space=smem, size = 0x200, scoped, tag = 'scoped memory for tpu_custom_call.1']
  #allocation4 [shape = 'f32[1,1]{1,0:T(1,128)S(6)}', space=smem, size = 0x200, scoped, tag = 'scoped memory for tpu_custom_call.1']
  #allocation5 [shape = 's32[1,1]{1,0:T(1,128)S(6)}', space=smem, size = 0x200, scoped, tag = 'scoped memory for tpu_custom_call.1']
  %s0 = inlined_call_operand.hbm [shape: bf16[8,1024], index: 0, kind: input, shape index: {}]
  %s1 = inlined_call_operand.hbm [shape: bf16[1024,128], index: 1, kind: input, shape index: {}]
  %s2 = inlined_call_operand.vmem [shape: f32[1,128], index: 2, kind: input, shape index: {}]
  %s3 = inlined_call_operand.vmem [shape: f32[1,128], index: 3, kind: input, shape index: {}]
  %s4 = inlined_call_operand.<no memory space> [shape: f32[1,1], index: 4, kind: input, shape index: {}]
  %s5 = inlined_call_operand.<no memory space> [shape: f32[1,1], index: 5, kind: input, shape index: {}]
  %s6 = inlined_call_operand.<no memory space> [shape: s32[1,1], index: 6, kind: input, shape index: {}]
  %s7 = inlined_call_operand.hbm [shape: f32[1,1], index: 7, kind: output, shape index: {}]
  %s8 = sld [smem:[#allocation0]]
  $region54: #{tpu_custom_call.1} parent=0
    _
  %s10 = ssub.s32 1, %s8
  %s11 = scalar_select 0, %s10, %s8
  %12 = sst [smem:[#allocation3]] %s4
  %13 = sst [smem:[#allocation4]] %s5
  %14 = sst [smem:[#allocation5]] %s6
  $region1: #{tpu_custom_call.1} parent=0
    #allocation6 [shape = 'u8[16384]{0}', space=vmem, size = 0x4000, scoped, tag = 'input window, operand 0, single buffered']
    #allocation7 [shape = 's32[1]{0}', space=sflag, size = 0x4, scoped, tag = 'scoped memory for tpu_custom_call.1']
    #allocation8 [shape = 's32[1]{0}', space=sflag, size = 0x4, scoped, tag = 'scoped memory for tpu_custom_call.1']
    #allocation9 [shape = 'u8[262144]{0}', space=vmem, size = 0x40000, scoped, tag = 'input window, operand 1, single buffered']
    #allocation10 [shape = 's32[1]{0}', space=sflag, size = 0x4, scoped, tag = 'scoped memory for tpu_custom_call.1']
    #allocation11 [shape = 'u8[512]{0}', space=vmem, size = 0x400, scoped, tag = 'output window, operand 0, single buffered']
    %15 = vsyncpa [#allocation7], 0
    %16 = vsyncpa [#allocation10], 0
    %17 = vsyncpa [#allocation8], 0
    // Predicated region
    $region2: #{tpu_custom_call.1} parent=1 // pred_check
      _
    $region3: #{tpu_custom_call.1} parent=1 // pred_check_branch
      %19 = sbr.rel (0) target = $region5
    $region4: #{tpu_custom_call.1} parent=1 // pred_region
      %s21 = ssub.s32 512, 512
      %22 = vsyncadd [#allocation7], %s21
      %s24 = sshll.u32 [#allocation6], 4
      %s25 = int_to_ptr.vmem [resolvable:$true] %s24
      %27 = dma.hbm_to_vmem [thread:$0]  %s0, 512, %s25, [#allocation7]
    $region5: #{tpu_custom_call.1} parent=1 // pred_fallthru
      _
    // Predicated region
    $region6: #{tpu_custom_call.1} parent=1 // pred_check
      _
    $region7: #{tpu_custom_call.1} parent=1 // pred_check_branch
      %29 = sbr.rel (0) target = $region9
    $region8: #{tpu_custom_call.1} parent=1 // pred_region
      %s31 = ssub.s32 8192, 8192
      %32 = vsyncadd [#allocation10], %s31
      %s33 = sshll.u32 [#allocation9], 4
      %s34 = int_to_ptr.vmem [resolvable:$true] %s33
      %39 = dma.hbm_to_vmem [thread:$0]  %s1, 8192, %s34, [#allocation10], 64, 64, 4
    $region9: #{tpu_custom_call.1} parent=1 // pred_fallthru
      _
    // Predicated region
    $region10: #{tpu_custom_call.1} parent=1 // pred_check
      _
    $region11: #{tpu_custom_call.1} parent=1 // pred_check_branch
      %41 = sbr.rel (0) target = $region13
    $region12: #{tpu_custom_call.1} parent=1 // pred_region
      _
    $region13: #{tpu_custom_call.1} parent=1 // pred_fallthru
      _
    // Predicated region
    $region14: #{tpu_custom_call.1} parent=1 // pred_check
      _
    $region15: #{tpu_custom_call.1} parent=1 // pred_check_branch
      %43 = sbr.rel (0) target = $region17
    $region16: #{tpu_custom_call.1} parent=1 // pred_region
      _
    $region17: #{tpu_custom_call.1} parent=1 // pred_fallthru
      _
    // Predicated region
    $region18: #{tpu_custom_call.1} parent=1 // pred_check
      _
    $region19: #{tpu_custom_call.1} parent=1 // pred_check_branch
      %45 = sbr.rel (0) target = $region21
    $region20: #{tpu_custom_call.1} parent=1 // pred_region
      _
    $region21: #{tpu_custom_call.1} parent=1 // pred_fallthru
      _
    // Predicated region
    $region22: #{tpu_custom_call.1} parent=1 // pred_check
      _
    $region23: #{tpu_custom_call.1} parent=1 // pred_check_branch
      %47 = sbr.rel (0) target = $region25
    $region24: #{tpu_custom_call.1} parent=1 // pred_region
      _
    $region25: #{tpu_custom_call.1} parent=1 // pred_fallthru
      _
    // Predicated region
    $region26: #{tpu_custom_call.1} parent=1 // pred_check
      _
    $region27: #{tpu_custom_call.1} parent=1 // pred_check_branch
      %49 = sbr.rel (0) target = $region29
    $region28: #{tpu_custom_call.1} parent=1 // pred_region
      _
    $region29: #{tpu_custom_call.1} parent=1 // pred_fallthru
      _
    // Predicated region
    $region30: #{tpu_custom_call.1} parent=1 // pred_check
      _
    $region31: #{tpu_custom_call.1} parent=1 // pred_check_branch
      %51 = sbr.rel (0) target = $region33
    $region32: #{tpu_custom_call.1} parent=1 // pred_region
      %52 = dma.done [#allocation7], 512
    $region33: #{tpu_custom_call.1} parent=1 // pred_fallthru
      _
    // Predicated region
    $region34: #{tpu_custom_call.1} parent=1 // pred_check
      _
    $region35: #{tpu_custom_call.1} parent=1 // pred_check_branch
      %54 = sbr.rel (0) target = $region37
    $region36: #{tpu_custom_call.1} parent=1 // pred_region
      %55 = dma.done [#allocation10], 8192
    $region37: #{tpu_custom_call.1} parent=1 // pred_fallthru
      _
    %p57 = scmp.eq.s32.totalorder 0, 0
    // Predicated region
    $region38: #{tpu_custom_call.1} parent=1 // pred_check
      %p58 = pneg %p57
    $region39: #{tpu_custom_call.1} parent=1 // pred_check_branch
      %60 = sbr.rel (%p58) target = $region41
    $region40: #{tpu_custom_call.1} parent=1 // pred_region
      %vm61 = vcmask 0
      %62 = vst.msk [vmem:[#allocation2] sm:$0x1] %vm61, 0.0
    $region41: #{tpu_custom_call.1} parent=1 // pred_fallthru
      _
    %v63 = vld [vmem:[#allocation6] sm:$0xff]
    %v64 = vld [vmem:[#allocation6 + $0x8] sm:$0xff]
    %v65 = vld [vmem:[#allocation6 + $0x10] sm:$0xff]
    %v66 = vld [vmem:[#allocation6 + $0x18] sm:$0xff]
    %v67 = vld [vmem:[#allocation9] sm:$0xf]
    %v68 = vld [vmem:[#allocation9 + $0x4] sm:$0xf]
    %v69 = vld [vmem:[#allocation9 + $0x8] sm:$0xf]
    %v70 = vld [vmem:[#allocation9 + $0xc] sm:$0xf]
    %v71 = vld [vmem:[#allocation9 + $0x10] sm:$0xf]
    %v72 = vld [vmem:[#allocation9 + $0x14] sm:$0xf]
    %v73 = vld [vmem:[#allocation9 + $0x18] sm:$0xf]
    %v74 = vld [vmem:[#allocation9 + $0x1c] sm:$0xf]
    %v75 = vld [vmem:[#allocation9 + $0x20] sm:$0xf]
    %v76 = vld [vmem:[#allocation9 + $0x24] sm:$0xf]
    %v77 = vld [vmem:[#allocation9 + $0x28] sm:$0xf]
    %v78 = vld [vmem:[#allocation9 + $0x2c] sm:$0xf]
    %v79 = vld [vmem:[#allocation9 + $0x30] sm:$0xf]
    %v80 = vld [vmem:[#allocation9 + $0x34] sm:$0xf]
    %v81 = vld [vmem:[#allocation9 + $0x38] sm:$0xf]
    %v82 = vld [vmem:[#allocation9 + $0x3c] sm:$0xf]
    %v83 = vld [vmem:[#allocation9 + $0x40] sm:$0xf]
    %v84 = vld [vmem:[#allocation9 + $0x44] sm:$0xf]
    %v85 = vld [vmem:[#allocation9 + $0x48] sm:$0xf]
    %v86 = vld [vmem:[#allocation9 + $0x4c] sm:$0xf]
    %v87 = vld [vmem:[#allocation9 + $0x50] sm:$0xf]
    %v88 = vld [vmem:[#allocation9 + $0x54] sm:$0xf]
    %v89 = vld [vmem:[#allocation9 + $0x58] sm:$0xf]
    %v90 = vld [vmem:[#allocation9 + $0x5c] sm:$0xf]
    %v91 = vld [vmem:[#allocation9 + $0x60] sm:$0xf]
    %v92 = vld [vmem:[#allocation9 + $0x64] sm:$0xf]
    %v93 = vld [vmem:[#allocation9 + $0x68] sm:$0xf]
    %v94 = vld [vmem:[#allocation9 + $0x6c] sm:$0xf]
    %v95 = vld [vmem:[#allocation9 + $0x70] sm:$0xf]
    %v96 = vld [vmem:[#allocation9 + $0x74] sm:$0xf]
    %v97 = vld [vmem:[#allocation9 + $0x78] sm:$0xf]
    %v98 = vld [vmem:[#allocation9 + $0x7c] sm:$0xf]
    %v99 = vld [vmem:[#allocation9 + $0x80] sm:$0xf]
    %v100 = vld [vmem:[#allocation9 + $0x84] sm:$0xf]
    %v101 = vld [vmem:[#allocation9 + $0x88] sm:$0xf]
    %v102 = vld [vmem:[#allocation9 + $0x8c] sm:$0xf]
    %v103 = vld [vmem:[#allocation9 + $0x90] sm:$0xf]
    %v104 = vld [vmem:[#allocation9 + $0x94] sm:$0xf]
    %v105 = vld [vmem:[#allocation9 + $0x98] sm:$0xf]
    %v106 = vld [vmem:[#allocation9 + $0x9c] sm:$0xf]
    %v107 = vld [vmem:[#allocation9 + $0xa0] sm:$0xf]
    %v108 = vld [vmem:[#allocation9 + $0xa4] sm:$0xf]
    %v109 = vld [vmem:[#allocation9 + $0xa8] sm:$0xf]
    %v110 = vld [vmem:[#allocation9 + $0xac] sm:$0xf]
    %v111 = vld [vmem:[#allocation9 + $0xb0] sm:$0xf]
    %v112 = vld [vmem:[#allocation9 + $0xb4] sm:$0xf]
    %v113 = vld [vmem:[#allocation9 + $0xb8] sm:$0xf]
    %v114 = vld [vmem:[#allocation9 + $0xbc] sm:$0xf]
    %v115 = vld [vmem:[#allocation9 + $0xc0] sm:$0xf]
    %v116 = vld [vmem:[#allocation9 + $0xc4] sm:$0xf]
    %v117 = vld [vmem:[#allocation9 + $0xc8] sm:$0xf]
    %v118 = vld [vmem:[#allocation9 + $0xcc] sm:$0xf]
    %v119 = vld [vmem:[#allocation9 + $0xd0] sm:$0xf]
    %v120 = vld [vmem:[#allocation9 + $0xd4] sm:$0xf]
    %v121 = vld [vmem:[#allocation9 + $0xd8] sm:$0xf]
    %v122 = vld [vmem:[#allocation9 + $0xdc] sm:$0xf]
    %v123 = vld [vmem:[#allocation9 + $0xe0] sm:$0xf]
    %v124 = vld [vmem:[#allocation9 + $0xe4] sm:$0xf]
    %v125 = vld [vmem:[#allocation9 + $0xe8] sm:$0xf]
    %v126 = vld [vmem:[#allocation9 + $0xec] sm:$0xf]
    %v127 = vld [vmem:[#allocation9 + $0xf0] sm:$0xf]
    %v128 = vld [vmem:[#allocation9 + $0xf4] sm:$0xf]
    %v129 = vld [vmem:[#allocation9 + $0xf8] sm:$0xf]
    %v130 = vld [vmem:[#allocation9 + $0xfc] sm:$0xf]
    %v131 = vld [vmem:[#allocation9 + $0x100] sm:$0xf]
    %v132 = vld [vmem:[#allocation9 + $0x104] sm:$0xf]
    %v133 = vld [vmem:[#allocation9 + $0x108] sm:$0xf]
    %v134 = vld [vmem:[#allocation9 + $0x10c] sm:$0xf]
    %v135 = vld [vmem:[#allocation9 + $0x110] sm:$0xf]
    %v136 = vld [vmem:[#allocation9 + $0x114] sm:$0xf]
    %v137 = vld [vmem:[#allocation9 + $0x118] sm:$0xf]
    %v138 = vld [vmem:[#allocation9 + $0x11c] sm:$0xf]
    %v139 = vld [vmem:[#allocation9 + $0x120] sm:$0xf]
    %v140 = vld [vmem:[#allocation9 + $0x124] sm:$0xf]
    %v141 = vld [vmem:[#allocation9 + $0x128] sm:$0xf]
    %v142 = vld [vmem:[#allocation9 + $0x12c] sm:$0xf]
    %v143 = vld [vmem:[#allocation9 + $0x130] sm:$0xf]
    %v144 = vld [vmem:[#allocation9 + $0x134] sm:$0xf]
    %v145 = vld [vmem:[#allocation9 + $0x138] sm:$0xf]
    %v146 = vld [vmem:[#allocation9 + $0x13c] sm:$0xf]
    %v147 = vld [vmem:[#allocation9 + $0x140] sm:$0xf]
    %v148 = vld [vmem:[#allocation9 + $0x144] sm:$0xf]
    %v149 = vld [vmem:[#allocation9 + $0x148] sm:$0xf]
    %v150 = vld [vmem:[#allocation9 + $0x14c] sm:$0xf]
    %v151 = vld [vmem:[#allocation9 + $0x150] sm:$0xf]
    %v152 = vld [vmem:[#allocation9 + $0x154] sm:$0xf]
    %v153 = vld [vmem:[#allocation9 + $0x158] sm:$0xf]
    %v154 = vld [vmem:[#allocation9 + $0x15c] sm:$0xf]
    %v155 = vld [vmem:[#allocation9 + $0x160] sm:$0xf]
    %v156 = vld [vmem:[#allocation9 + $0x164] sm:$0xf]
    %v157 = vld [vmem:[#allocation9 + $0x168] sm:$0xf]
    %v158 = vld [vmem:[#allocation9 + $0x16c] sm:$0xf]
    %v159 = vld [vmem:[#allocation9 + $0x170] sm:$0xf]
    %v160 = vld [vmem:[#allocation9 + $0x174] sm:$0xf]
    %v161 = vld [vmem:[#allocation9 + $0x178] sm:$0xf]
    %v162 = vld [vmem:[#allocation9 + $0x17c] sm:$0xf]
    %v163 = vld [vmem:[#allocation9 + $0x180] sm:$0xf]
    %v164 = vld [vmem:[#allocation9 + $0x184] sm:$0xf]
    %v165 = vld [vmem:[#allocation9 + $0x188] sm:$0xf]
    %v166 = vld [vmem:[#allocation9 + $0x18c] sm:$0xf]
    %v167 = vld [vmem:[#allocation9 + $0x190] sm:$0xf]
    %v168 = vld [vmem:[#allocation9 + $0x194] sm:$0xf]
    %v169 = vld [vmem:[#allocation9 + $0x198] sm:$0xf]
    %v170 = vld [vmem:[#allocation9 + $0x19c] sm:$0xf]
    %v171 = vld [vmem:[#allocation9 + $0x1a0] sm:$0xf]
    %v172 = vld [vmem:[#allocation9 + $0x1a4] sm:$0xf]
    %v173 = vld [vmem:[#allocation9 + $0x1a8] sm:$0xf]
    %v174 = vld [vmem:[#allocation9 + $0x1ac] sm:$0xf]
    %v175 = vld [vmem:[#allocation9 + $0x1b0] sm:$0xf]
    %v176 = vld [vmem:[#allocation9 + $0x1b4] sm:$0xf]
    %v177 = vld [vmem:[#allocation9 + $0x1b8] sm:$0xf]
    %v178 = vld [vmem:[#allocation9 + $0x1bc] sm:$0xf]
    %v179 = vld [vmem:[#allocation9 + $0x1c0] sm:$0xf]
    %v180 = vld [vmem:[#allocation9 + $0x1c4] sm:$0xf]
    %v181 = vld [vmem:[#allocation9 + $0x1c8] sm:$0xf]
    %v182 = vld [vmem:[#allocation9 + $0x1cc] sm:$0xf]
    %v183 = vld [vmem:[#allocation9 + $0x1d0] sm:$0xf]
    %v184 = vld [vmem:[#allocation9 + $0x1d4] sm:$0xf]
    %v185 = vld [vmem:[#allocation9 + $0x1d8] sm:$0xf]
    %v186 = vld [vmem:[#allocation9 + $0x1dc] sm:$0xf]
    %v187 = vld [vmem:[#allocation9 + $0x1e0] sm:$0xf]
    %v188 = vld [vmem:[#allocation9 + $0x1e4] sm:$0xf]
    %v189 = vld [vmem:[#allocation9 + $0x1e8] sm:$0xf]
    %v190 = vld [vmem:[#allocation9 + $0x1ec] sm:$0xf]
    %v191 = vld [vmem:[#allocation9 + $0x1f0] sm:$0xf]
    %v192 = vld [vmem:[#allocation9 + $0x1f4] sm:$0xf]
    %v193 = vld [vmem:[#allocation9 + $0x1f8] sm:$0xf]
    %v194 = vld [vmem:[#allocation9 + $0x1fc] sm:$0xf]
    %v195 = vld [vmem:[%s2] sm:$0x1]
    %v197 = vlaneseq
    %v198 = vshrl.u32 %v197, 7
    %v199 = vsub.s32 0, %v198
    %v200 = vrot.slane %v195, %v199
    %v206 = vunpack.c.l.b16 %v63
    %v207 = vunpack.c.h.b16 %v63
    %v208 = vunpack.c.l.b16 %v64
    %v209 = vunpack.c.h.b16 %v64
    %v210 = vunpack.c.l.b16 %v65
    %v211 = vunpack.c.h.b16 %v65
    %v212 = vunpack.c.l.b16 %v66
    %v213 = vunpack.c.h.b16 %v66
    %v214 = vpack.c.b16 %v206, %v206
    %v215 = vpack.c.b16 %v207, %v207
    %v216 = vpack.c.b16 %v208, %v208
    %v217 = vpack.c.b16 %v209, %v209
    %v218 = vpack.c.b16 %v210, %v210
    %v219 = vpack.c.b16 %v211, %v211
    %v220 = vpack.c.b16 %v212, %v212
    %v221 = vpack.c.b16 %v213, %v213
    %v358 = vunpack.c.l.b16 %v67
    %v359 = vunpack.c.l.b16 %v68
    %v360 = vunpack.c.l.b16 %v69
    %v361 = vunpack.c.l.b16 %v70
    %v362 = vunpack.c.l.b16 %v71
    %v363 = vunpack.c.l.b16 %v72
    %v364 = vunpack.c.l.b16 %v73
    %v365 = vunpack.c.l.b16 %v74
    %v366 = vunpack.c.l.b16 %v75
    %v367 = vunpack.c.l.b16 %v76
    %v368 = vunpack.c.l.b16 %v77
    %v369 = vunpack.c.l.b16 %v78
    %v370 = vunpack.c.l.b16 %v79
    %v371 = vunpack.c.l.b16 %v80
    %v372 = vunpack.c.l.b16 %v81
    %v373 = vunpack.c.l.b16 %v82
    %v374 = vunpack.c.l.b16 %v83
    %v375 = vunpack.c.l.b16 %v84
    %v376 = vunpack.c.l.b16 %v85
    %v377 = vunpack.c.l.b16 %v86
    %v378 = vunpack.c.l.b16 %v87
    %v379 = vunpack.c.l.b16 %v88
    %v380 = vunpack.c.l.b16 %v89
    %v381 = vunpack.c.l.b16 %v90
    %v382 = vunpack.c.l.b16 %v91
    %v383 = vunpack.c.l.b16 %v92
    %v384 = vunpack.c.l.b16 %v93
    %v385 = vunpack.c.l.b16 %v94
    %v386 = vunpack.c.l.b16 %v95
    %v387 = vunpack.c.l.b16 %v96
    %v388 = vunpack.c.l.b16 %v97
    %v389 = vunpack.c.l.b16 %v98
    %v390 = vunpack.c.l.b16 %v99
    %v391 = vunpack.c.l.b16 %v100
    %v392 = vunpack.c.l.b16 %v101
    %v393 = vunpack.c.l.b16 %v102
    %v394 = vunpack.c.l.b16 %v103
    %v395 = vunpack.c.l.b16 %v104
    %v396 = vunpack.c.l.b16 %v105
    %v397 = vunpack.c.l.b16 %v106
    %v398 = vunpack.c.l.b16 %v107
    %v399 = vunpack.c.l.b16 %v108
    %v400 = vunpack.c.l.b16 %v109
    %v401 = vunpack.c.l.b16 %v110
    %v402 = vunpack.c.l.b16 %v111
    %v403 = vunpack.c.l.b16 %v112
    %v404 = vunpack.c.l.b16 %v113
    %v405 = vunpack.c.l.b16 %v114
    %v406 = vunpack.c.l.b16 %v115
    %v407 = vunpack.c.l.b16 %v116
    %v408 = vunpack.c.l.b16 %v117
    %v409 = vunpack.c.l.b16 %v118
    %v410 = vunpack.c.l.b16 %v119
    %v411 = vunpack.c.l.b16 %v120
    %v412 = vunpack.c.l.b16 %v121
    %v413 = vunpack.c.l.b16 %v122
    %v414 = vunpack.c.l.b16 %v123
    %v415 = vunpack.c.l.b16 %v124
    %v416 = vunpack.c.l.b16 %v125
    %v417 = vunpack.c.l.b16 %v126
    %v418 = vunpack.c.l.b16 %v127
    %v419 = vunpack.c.l.b16 %v128
    %v420 = vunpack.c.l.b16 %v129
    %v421 = vunpack.c.l.b16 %v130
    %v422 = vunpack.c.l.b16 %v131
    %v423 = vunpack.c.l.b16 %v132
    %v424 = vunpack.c.l.b16 %v133
    %v425 = vunpack.c.l.b16 %v134
    %v426 = vunpack.c.l.b16 %v135
    %v427 = vunpack.c.l.b16 %v136
    %v428 = vunpack.c.l.b16 %v137
    %v429 = vunpack.c.l.b16 %v138
    %v430 = vunpack.c.l.b16 %v139
    %v431 = vunpack.c.l.b16 %v140
    %v432 = vunpack.c.l.b16 %v141
    %v433 = vunpack.c.l.b16 %v142
    %v434 = vunpack.c.l.b16 %v143
    %v435 = vunpack.c.l.b16 %v144
    %v436 = vunpack.c.l.b16 %v145
    %v437 = vunpack.c.l.b16 %v146
    %v438 = vunpack.c.l.b16 %v147
    %v439 = vunpack.c.l.b16 %v148
    %v440 = vunpack.c.l.b16 %v149
    %v441 = vunpack.c.l.b16 %v150
    %v442 = vunpack.c.l.b16 %v151
    %v443 = vunpack.c.l.b16 %v152
    %v444 = vunpack.c.l.b16 %v153
    %v445 = vunpack.c.l.b16 %v154
    %v446 = vunpack.c.l.b16 %v155
    %v447 = vunpack.c.l.b16 %v156
    %v448 = vunpack.c.l.b16 %v157
    %v449 = vunpack.c.l.b16 %v158
    %v450 = vunpack.c.l.b16 %v159
    %v451 = vunpack.c.l.b16 %v160
    %v452 = vunpack.c.l.b16 %v161
    %v453 = vunpack.c.l.b16 %v162
    %v454 = vunpack.c.l.b16 %v163
    %v455 = vunpack.c.l.b16 %v164
    %v456 = vunpack.c.l.b16 %v165
    %v457 = vunpack.c.l.b16 %v166
    %v458 = vunpack.c.l.b16 %v167
    %v459 = vunpack.c.l.b16 %v168
    %v460 = vunpack.c.l.b16 %v169
    %v461 = vunpack.c.l.b16 %v170
    %v462 = vunpack.c.l.b16 %v171
    %v463 = vunpack.c.l.b16 %v172
    %v464 = vunpack.c.l.b16 %v173
    %v465 = vunpack.c.l.b16 %v174
    %v466 = vunpack.c.l.b16 %v175
    %v467 = vunpack.c.l.b16 %v176
    %v468 = vunpack.c.l.b16 %v177
    %v469 = vunpack.c.l.b16 %v178
    %v470 = vunpack.c.l.b16 %v179
    %v471 = vunpack.c.l.b16 %v180
    %v472 = vunpack.c.l.b16 %v181
    %v473 = vunpack.c.l.b16 %v182
    %v474 = vunpack.c.l.b16 %v183
    %v475 = vunpack.c.l.b16 %v184
    %v476 = vunpack.c.l.b16 %v185
    %v477 = vunpack.c.l.b16 %v186
    %v478 = vunpack.c.l.b16 %v187
    %v479 = vunpack.c.l.b16 %v188
    %v480 = vunpack.c.l.b16 %v189
    %v481 = vunpack.c.l.b16 %v190
    %v482 = vunpack.c.l.b16 %v191
    %v483 = vunpack.c.l.b16 %v192
    %v484 = vunpack.c.l.b16 %v193
    %v485 = vunpack.c.l.b16 %v194
    %v486 = vpack.c.b16 %v359, %v358
    %v487 = vpack.c.b16 %v361, %v360
    %v488 = vpack.c.b16 %v363, %v362
    %v489 = vpack.c.b16 %v365, %v364
    %v490 = vpack.c.b16 %v367, %v366
    %v491 = vpack.c.b16 %v369, %v368
    %v492 = vpack.c.b16 %v371, %v370
    %v493 = vpack.c.b16 %v373, %v372
    %v494 = vpack.c.b16 %v375, %v374
    %v495 = vpack.c.b16 %v377, %v376
    %v496 = vpack.c.b16 %v379, %v378
    %v497 = vpack.c.b16 %v381, %v380
    %v498 = vpack.c.b16 %v383, %v382
    %v499 = vpack.c.b16 %v385, %v384
    %v500 = vpack.c.b16 %v387, %v386
    %v501 = vpack.c.b16 %v389, %v388
    %v502 = vpack.c.b16 %v391, %v390
    %v503 = vpack.c.b16 %v393, %v392
    %v504 = vpack.c.b16 %v395, %v394
    %v505 = vpack.c.b16 %v397, %v396
    %v506 = vpack.c.b16 %v399, %v398
    %v507 = vpack.c.b16 %v401, %v400
    %v508 = vpack.c.b16 %v403, %v402
    %v509 = vpack.c.b16 %v405, %v404
    %v510 = vpack.c.b16 %v407, %v406
    %v511 = vpack.c.b16 %v409, %v408
    %v512 = vpack.c.b16 %v411, %v410
    %v513 = vpack.c.b16 %v413, %v412
    %v514 = vpack.c.b16 %v415, %v414
    %v515 = vpack.c.b16 %v417, %v416
    %v516 = vpack.c.b16 %v419, %v418
    %v517 = vpack.c.b16 %v421, %v420
    %v518 = vpack.c.b16 %v423, %v422
    %v519 = vpack.c.b16 %v425, %v424
    %v520 = vpack.c.b16 %v427, %v426
    %v521 = vpack.c.b16 %v429, %v428
    %v522 = vpack.c.b16 %v431, %v430
    %v523 = vpack.c.b16 %v433, %v432
    %v524 = vpack.c.b16 %v435, %v434
    %v525 = vpack.c.b16 %v437, %v436
    %v526 = vpack.c.b16 %v439, %v438
    %v527 = vpack.c.b16 %v441, %v440
    %v528 = vpack.c.b16 %v443, %v442
    %v529 = vpack.c.b16 %v445, %v444
    %v530 = vpack.c.b16 %v447, %v446
    %v531 = vpack.c.b16 %v449, %v448
    %v532 = vpack.c.b16 %v451, %v450
    %v533 = vpack.c.b16 %v453, %v452
    %v534 = vpack.c.b16 %v455, %v454
    %v535 = vpack.c.b16 %v457, %v456
    %v536 = vpack.c.b16 %v459, %v458
    %v537 = vpack.c.b16 %v461, %v460
    %v538 = vpack.c.b16 %v463, %v462
    %v539 = vpack.c.b16 %v465, %v464
    %v540 = vpack.c.b16 %v467, %v466
    %v541 = vpack.c.b16 %v469, %v468
    %v542 = vpack.c.b16 %v471, %v470
    %v543 = vpack.c.b16 %v473, %v472
    %v544 = vpack.c.b16 %v475, %v474
    %v545 = vpack.c.b16 %v477, %v476
    %v546 = vpack.c.b16 %v479, %v478
    %v547 = vpack.c.b16 %v481, %v480
    %v548 = vpack.c.b16 %v483, %v482
    %v549 = vpack.c.b16 %v485, %v484
    %614 = vmatprep.subr.bf16.mxu0 0
    %615 = vmatpush1.bf16.msra.mxu0 %v493
    %616 = vmatprep.subr.bf16.mxu0 0
    %617 = vmatpush1.bf16.msra.mxu0 %v492
    %618 = vmatprep.subr.bf16.mxu0 0
    %619 = vmatpush1.bf16.msra.mxu0 %v491
    %620 = vmatprep.subr.bf16.mxu0 0
    %621 = vmatpush1.bf16.msra.mxu0 %v490
    %622 = vmatprep.subr.bf16.mxu0 0
    %623 = vmatpush1.bf16.msra.mxu0 %v489
    %624 = vmatprep.subr.bf16.mxu0 0
    %625 = vmatpush1.bf16.msra.mxu0 %v488
    %626 = vmatprep.subr.bf16.mxu0 0
    %627 = vmatpush1.bf16.msra.mxu0 %v487
    %628 = vmatprep.subr.bf16.mxu0 0
    %629 = vmatpush1.bf16.msra.mxu0 %v486
    %630 = vmatprep.subr.bf16.mxu0 0
    %631 = vmatpush2.bf16.msra.mxu0 %v501
    %632 = vmatprep.subr.bf16.mxu0 0
    %633 = vmatpush2.bf16.msra.mxu0 %v500
    %634 = vmatprep.subr.bf16.mxu0 0
    %635 = vmatpush2.bf16.msra.mxu0 %v499
    %636 = vmatprep.subr.bf16.mxu0 0
    %637 = vmatpush2.bf16.msra.mxu0 %v498
    %638 = vmatprep.subr.bf16.mxu0 0
    %639 = vmatpush2.bf16.msra.mxu0 %v497
    %640 = vmatprep.subr.bf16.mxu0 0
    %641 = vmatpush2.bf16.msra.mxu0 %v496
    %642 = vmatprep.subr.bf16.mxu0 0
    %643 = vmatpush2.bf16.msra.mxu0 %v495
    %644 = vmatprep.subr.bf16.mxu0 0
    %645 = vmatpush2.bf16.msra.mxu0 %v494
    %646 = vmatprep.mubr.bf16.mxu0 %v215
    %647 = vmatmul.mubr.bf16.gmra.mxu0 %v214
    %v648 = vpop.f32.mrf.mxu0
    %v649 = vadd.f32 %v200, %v648
    %v650 = vpop.f32.mrf.mxu0
    %v651 = vpop.f32.mrf.mxu0
    %v652 = vpop.f32.mrf.mxu0
    %653 = vdwg.mxu0
    %654 = vmatprep.subr.bf16.mxu0 0
    %655 = vmatpush1.bf16.msra.mxu0 %v509
    %656 = vmatprep.subr.bf16.mxu0 0
    %657 = vmatpush1.bf16.msra.mxu0 %v508
    %658 = vmatprep.subr.bf16.mxu0 0
    %659 = vmatpush1.bf16.msra.mxu0 %v507
    %660 = vmatprep.subr.bf16.mxu0 0
    %661 = vmatpush1.bf16.msra.mxu0 %v506
    %662 = vmatprep.subr.bf16.mxu0 0
    %663 = vmatpush1.bf16.msra.mxu0 %v505
    %664 = vmatprep.subr.bf16.mxu0 0
    %665 = vmatpush1.bf16.msra.mxu0 %v504
    %666 = vmatprep.subr.bf16.mxu0 0
    %667 = vmatpush1.bf16.msra.mxu0 %v503
    %668 = vmatprep.subr.bf16.mxu0 0
    %669 = vmatpush1.bf16.msra.mxu0 %v502
    %670 = vmatprep.subr.bf16.mxu0 0
    %671 = vmatpush2.bf16.msra.mxu0 %v517
    %672 = vmatprep.subr.bf16.mxu0 0
    %673 = vmatpush2.bf16.msra.mxu0 %v516
    %674 = vmatprep.subr.bf16.mxu0 0
    %675 = vmatpush2.bf16.msra.mxu0 %v515
    %676 = vmatprep.subr.bf16.mxu0 0
    %677 = vmatpush2.bf16.msra.mxu0 %v514
    %678 = vmatprep.subr.bf16.mxu0 0
    %679 = vmatpush2.bf16.msra.mxu0 %v513
    %680 = vmatprep.subr.bf16.mxu0 0
    %681 = vmatpush2.bf16.msra.mxu0 %v512
    %682 = vmatprep.subr.bf16.mxu0 0
    %683 = vmatpush2.bf16.msra.mxu0 %v511
    %684 = vmatprep.subr.bf16.mxu0 0
    %685 = vmatpush2.bf16.msra.mxu0 %v510
    %686 = vmatprep.mubr.bf16.mxu0 %v217
    %687 = vmatmul.mubr.bf16.gmra.mxu0 %v216
    %v688 = vpop.f32.mrf.mxu0
    %v689 = vadd.f32 %v649, %v688
    %v690 = vpop.f32.mrf.mxu0
    %v691 = vpop.f32.mrf.mxu0
    %v692 = vpop.f32.mrf.mxu0
    %693 = vdwg.mxu0
    %694 = vmatprep.subr.bf16.mxu0 0
    %695 = vmatpush1.bf16.msra.mxu0 %v525
    %696 = vmatprep.subr.bf16.mxu0 0
    %697 = vmatpush1.bf16.msra.mxu0 %v524
    %698 = vmatprep.subr.bf16.mxu0 0
    %699 = vmatpush1.bf16.msra.mxu0 %v523
    %700 = vmatprep.subr.bf16.mxu0 0
    %701 = vmatpush1.bf16.msra.mxu0 %v522
    %702 = vmatprep.subr.bf16.mxu0 0
    %703 = vmatpush1.bf16.msra.mxu0 %v521
    %704 = vmatprep.subr.bf16.mxu0 0
    %705 = vmatpush1.bf16.msra.mxu0 %v520
    %706 = vmatprep.subr.bf16.mxu0 0
    %707 = vmatpush1.bf16.msra.mxu0 %v519
    %708 = vmatprep.subr.bf16.mxu0 0
    %709 = vmatpush1.bf16.msra.mxu0 %v518
    %710 = vmatprep.subr.bf16.mxu0 0
    %711 = vmatpush2.bf16.msra.mxu0 %v533
    %712 = vmatprep.subr.bf16.mxu0 0
    %713 = vmatpush2.bf16.msra.mxu0 %v532
    %714 = vmatprep.subr.bf16.mxu0 0
    %715 = vmatpush2.bf16.msra.mxu0 %v531
    %716 = vmatprep.subr.bf16.mxu0 0
    %717 = vmatpush2.bf16.msra.mxu0 %v530
    %718 = vmatprep.subr.bf16.mxu0 0
    %719 = vmatpush2.bf16.msra.mxu0 %v529
    %720 = vmatprep.subr.bf16.mxu0 0
    %721 = vmatpush2.bf16.msra.mxu0 %v528
    %722 = vmatprep.subr.bf16.mxu0 0
    %723 = vmatpush2.bf16.msra.mxu0 %v527
    %724 = vmatprep.subr.bf16.mxu0 0
    %725 = vmatpush2.bf16.msra.mxu0 %v526
    %726 = vmatprep.mubr.bf16.mxu0 %v219
    %727 = vmatmul.mubr.bf16.gmra.mxu0 %v218
    %v728 = vpop.f32.mrf.mxu0
    %v729 = vadd.f32 %v689, %v728
    %v730 = vpop.f32.mrf.mxu0
    %v731 = vpop.f32.mrf.mxu0
    %v732 = vpop.f32.mrf.mxu0
    %733 = vdwg.mxu0
    %734 = vmatprep.subr.bf16.mxu0 0
    %735 = vmatpush1.bf16.msra.mxu0 %v541
    %736 = vmatprep.subr.bf16.mxu0 0
    %737 = vmatpush1.bf16.msra.mxu0 %v540
    %738 = vmatprep.subr.bf16.mxu0 0
    %739 = vmatpush1.bf16.msra.mxu0 %v539
    %740 = vmatprep.subr.bf16.mxu0 0
    %741 = vmatpush1.bf16.msra.mxu0 %v538
    %742 = vmatprep.subr.bf16.mxu0 0
    %743 = vmatpush1.bf16.msra.mxu0 %v537
    %744 = vmatprep.subr.bf16.mxu0 0
    %745 = vmatpush1.bf16.msra.mxu0 %v536
    %746 = vmatprep.subr.bf16.mxu0 0
    %747 = vmatpush1.bf16.msra.mxu0 %v535
    %748 = vmatprep.subr.bf16.mxu0 0
    %749 = vmatpush1.bf16.msra.mxu0 %v534
    %750 = vmatprep.subr.bf16.mxu0 0
    %751 = vmatpush2.bf16.msra.mxu0 %v549
    %752 = vmatprep.subr.bf16.mxu0 0
    %753 = vmatpush2.bf16.msra.mxu0 %v548
    %754 = vmatprep.subr.bf16.mxu0 0
    %755 = vmatpush2.bf16.msra.mxu0 %v547
    %756 = vmatprep.subr.bf16.mxu0 0
    %757 = vmatpush2.bf16.msra.mxu0 %v546
    %758 = vmatprep.subr.bf16.mxu0 0
    %759 = vmatpush2.bf16.msra.mxu0 %v545
    %760 = vmatprep.subr.bf16.mxu0 0
    %761 = vmatpush2.bf16.msra.mxu0 %v544
    %762 = vmatprep.subr.bf16.mxu0 0
    %763 = vmatpush2.bf16.msra.mxu0 %v543
    %764 = vmatprep.subr.bf16.mxu0 0
    %765 = vmatpush2.bf16.msra.mxu0 %v542
    %766 = vmatprep.mubr.bf16.mxu0 %v221
    %767 = vmatmul.mubr.bf16.gmra.mxu0 %v220
    %v768 = vpop.f32.mrf.mxu0
    %v769 = vadd.f32 %v729, %v768
    %v770 = vpop.f32.mrf.mxu0
    %v771 = vpop.f32.mrf.mxu0
    %v772 = vpop.f32.mrf.mxu0
    %773 = vdwg.mxu0
    %vm774 = vcmp.gt.f32.partialorder %v769, 0.0
    %v775 = vmul.f32 %v769, 0.2
    %v776 = vsel %vm774, %v769, %v775
    %v777 = vld [vmem:[%s3] sm:$0x1]
    %v779 = vlaneseq
    %v780 = vshrl.u32 %v779, 7
    %v781 = vsub.s32 0, %v780
    %v782 = vrot.slane %v777, %v781
    %v784 = vmul.f32 %v776, %v782
    %785 = vadd.xlane.f32.xlu0 %v784
    %v786 = vpop.xlane.xlu0 %785
    %s787 = sld [smem:[#allocation3]]
    %v788 = vstv %s787
    %v789 = vadd.f32 %v786, %v788
    %v790 = vmax.f32 %v789, 0.0
    %v791 = vand.u32 2147483647, %v789
    %v792 = vsub.f32 0.0, %v791
    %v793 = vmul.f32 %v792, 1.442695
    %v794 = vpow.pop %v793
    %v795 = vadd.f32 %v794, 1.0
    %v796 = vlog2.pop %v795
    %v797 = vmul.f32 %v796, 0.6931472
    %v798 = vadd.f32 %v790, %v797
    %v799 = vsub.f32 0.0, %v798
    %s800 = smul.u32 0, 8
    %v801 = vlaneseq
    %v802 = vshrl.u32 %v801, 7
    %v803 = vstv %s800
    %v804 = vadd.s32 %v803, %v802
    %s805 = sld [smem:[#allocation5]]
    %v806 = vstv %s805
    %vm807 = vcmp.lt.s32.totalorder %v804, %v806
    %v808 = vsel %vm807, %v799, 0.0
    %v809 = vld [vmem:[#allocation2] sm:$0x1]
    %vm810 = vcmask 7168
    %v811 = vsel %vm810, %v808, 0.0
    %812 = vadd.xlane.f32.xlu0 %v811
    %v813 = vpop.xlane.xlu0 %812
    %v814 = vrot.slane %v813, 4
    %v815 = vadd.f32 %v813, %v814
    %v816 = vrot.slane %v815, 2
    %v817 = vadd.f32 %v815, %v816
    %v818 = vrot.slane %v817, 1
    %v819 = vadd.f32 %v817, %v818
    %s820 = vtos %v819
    %v821 = vstv %s820
    %v822 = vadd.f32 %v809, %v821
    %vm823 = vcmask 0
    %824 = vst.msk [vmem:[#allocation2] sm:$0x1] %vm823, %v822
    // Predicated region
    $region42: #{tpu_custom_call.1} parent=1 // pred_check
      %p825 = pneg %p57
    $region43: #{tpu_custom_call.1} parent=1 // pred_check_branch
      %827 = sbr.rel (%p825) target = $region45
    $region44: #{tpu_custom_call.1} parent=1 // pred_region
      %v828 = vld [vmem:[#allocation2] sm:$0x1]
      %s829 = sld [smem:[#allocation4]]
      %v830 = vstv %s829
      %v831 = vmul.f32 %v828, %v830
      %832 = vst.msk [vmem:[#allocation11] sm:$0x1] %vm823, %v831
    $region45: #{tpu_custom_call.1} parent=1 // pred_fallthru
      _
    // Predicated region
    $region46: #{tpu_custom_call.1} parent=1 // pred_check
      _
    $region47: #{tpu_custom_call.1} parent=1 // pred_check_branch
      %834 = sbr.rel (0) target = $region49
    $region48: #{tpu_custom_call.1} parent=1 // pred_region
      %s836 = ssub.s32 16, 16
      %837 = vsyncadd [#allocation8], %s836
      %s839 = sshll.u32 [#allocation11], 4
      %s840 = int_to_ptr.vmem [resolvable:$true] %s839
      %842 = dma.vmem_to_hbm [thread:$0]  %s840, 16, %s7, [#allocation8]
    $region49: #{tpu_custom_call.1} parent=1 // pred_fallthru
      _
    // Predicated region
    $region50: #{tpu_custom_call.1} parent=1 // pred_check
      _
    $region51: #{tpu_custom_call.1} parent=1 // pred_check_branch
      %844 = sbr.rel (0) target = $region53
    $region52: #{tpu_custom_call.1} parent=1 // pred_region
      %845 = dma.done [#allocation8], 16
    $region53: #{tpu_custom_call.1} parent=1 // pred_fallthru
      _
    %846 = vsyncpa [#allocation7], 1
    %847 = vsyncpa [#allocation10], 1
    %848 = vsyncpa [#allocation8], 1

</llo_original>
